<compile_context>
chip_gen: v6e
topology: v6e:2x2x1
jax: 0.10.0
libtpu: 0.0.40
codegen_flags: <defaults>
</compile_context>

<pallas_src>
import functools

import jax
import jax.numpy as jnp
from jax.experimental import pallas as pl
from jax.experimental.pallas import tpu as pltpu

L2_EPS = 1e-12  # F.normalize clamp_min eps


def _fc_l2norm_kernel(x_ref, w_ref, b_ref, o_ref):
    # Cast activations to bf16 in-kernel (cheap VPU work, overlapped with the
    # MXU); weights arrive pre-cast as bf16.  Accumulate in f32 on the MXU.
    x = x_ref[...].astype(jnp.bfloat16)
    y = jnp.dot(x, w_ref[...], preferred_element_type=jnp.float32)
    y = y + b_ref[...]
    # L2 normalize along the last dim (matches F.normalize(p=2, dim=-1)).
    # Clamp moved inside the rsqrt: max(||y||, eps) -> max(||y||^2, eps^2);
    # differs only for effectively-zero rows (norm < 1e-12).
    ss = jnp.sum(y * y, axis=-1, keepdims=True)
    inv = jax.lax.rsqrt(jnp.maximum(ss, L2_EPS * L2_EPS))
    o_ref[...] = (y * inv).astype(o_ref.dtype)


@functools.partial(jax.jit, static_argnames=("block_b",))
def naver_mlp_forward(x, w, b, *, block_b=512):
    """y = l2_normalize(x @ w + b, axis=-1).

    x: [B, IN] float32 (cast to bf16 inside the kernel).
    w: [IN, OUT] — PyTorch fc.weight.T, ideally pre-cast to bf16 (init_params).
    b: [1, OUT] float32.
    Accumulation and the normalization epilogue are f32; output is f32.
    """
    B, in_dim = x.shape
    out_dim = w.shape[1]

    # Batch tile: as large as requested, but keep >=2 grid steps when B allows
    # so the "parallel" axis can be split across TensorCores (v7x megacore).
    tb = min(block_b, B)
    if tb >= B and B >= 16:
        tb = -(-B // 2)          # ceil(B/2) -> 2 grid steps
    tb = max(8, (tb // 8) * 8)   # keep the sublane dim a multiple of 8

    # Parameters are expected pre-cast (init_params); these are static no-ops
    # in that case and only guard against callers passing raw f32 weights.
    if w.dtype != jnp.bfloat16:
        w = w.astype(jnp.bfloat16)
    if b.dtype != jnp.float32:
        b = b.astype(jnp.float32)

    grid = (pl.cdiv(B, tb),)
    return pl.pallas_call(
        _fc_l2norm_kernel,
        out_shape=jax.ShapeDtypeStruct((B, out_dim), jnp.float32),
        grid=grid,
        in_specs=[
            # x: new batch tile each grid step (double-buffered by Pallas).
            pl.BlockSpec((tb, in_dim), lambda i: (i, 0)),
            # w: constant block index -> VMEM-resident across the grid;
            # single-buffered since it never changes (saves a full W buffer).
            pl.BlockSpec(
                (in_dim, out_dim),
                lambda i: (0, 0),
                pipeline_mode=pl.Buffered(1),
            ),
            # b: constant, tiny.
            pl.BlockSpec((1, out_dim), lambda i: (0, 0)),
        ],
        out_specs=pl.BlockSpec((tb, out_dim), lambda i: (i, 0)),
        compiler_params=pltpu.CompilerParams(
            dimension_semantics=("parallel",),
            # Resident bf16 W (8 MiB at 2048x2048) + x/out tiles + the f32
            # [TB, OUT] intermediate overshoot the 16/32 MiB scoped defaults;
            # 48 MiB fits every generation (64 MiB physical per TC on v7x).
            vmem_limit_bytes=48 * 1024 * 1024,
        ),
    )(x, w, b)


def init_params(key, in_dim, out_dim):
    """Deterministic synthetic fc parameters, pre-cast to kernel dtypes."""
    k1, k2 = jax.random.split(key)
    w = jax.random.normal(k1, (in_dim, out_dim), jnp.float32) * (
        1.0 / jnp.sqrt(in_dim)
    )
    b = jax.random.normal(k2, (1, out_dim), jnp.float32) * 0.01
    # Pre-cast once (inference-style layer: weights never change per call).
    return w.astype(jnp.bfloat16), b.astype(jnp.float32)


if __name__ == "__main__":
    # Small shapes consistent with the module (scaled down from 2048 -> 256),
    # B chosen so the batch grid has >1 step (exercises weight residency and
    # the "parallel" axis split).
    B, IN_DIM, OUT_DIM = 256, 256, 256

    key = jax.random.PRNGKey(0)
    kx, kp = jax.random.split(key)
    x = jax.random.normal(kx, (B, IN_DIM), jnp.float32)
    w_bf16, b_f32 = init_params(kp, IN_DIM, OUT_DIM)

    out = naver_mlp_forward(x, w_bf16, b_f32)
    jax.block_until_ready(out)

    # Plain-JAX f32 reference of fc + l2_normalize (weights widened from the
    # same bf16 values the kernel uses, so only the activation cast differs).
    w_f32 = w_bf16.astype(jnp.float32)

    def ref(xx):
        y = xx @ w_f32 + b_f32
        norm = jnp.sqrt(jnp.sum(y * y, axis=-1, keepdims=True))
        return y / jnp.maximum(norm, L2_EPS)

    expected = ref(x)
    assert out.shape == (B, OUT_DIM)
    # bf16 activation/weight path -> loosened tolerance vs the f32 reference.
    assert jnp.allclose(out, expected, atol=3e-2, rtol=3e-2)
    # Output rows should be unit-norm.
    row_norms = jnp.sqrt(jnp.sum(out * out, axis=-1))
    assert jnp.allclose(row_norms, jnp.ones((B,), jnp.float32), atol=1e-2)

    print("KERNEL_OK")
</pallas_src>

<mosaic_0001>
module attributes {stable_mosaic.version = 11 : i64} {
  func.func @_fc_l2norm_kernel(%arg0: i32, %arg1: memref<128x256xf32, #tpu.memory_space<vmem>>, %arg2: memref<256x256xbf16, #tpu.memory_space<vmem>>, %arg3: memref<1x256xf32, #tpu.memory_space<vmem>>, %arg4: memref<128x256xf32, #tpu.memory_space<vmem>>) attributes {dimension_semantics = [#tpu.dimension_semantics<parallel>], iteration_bounds = array<i64: 2>, scalar_prefetch = 0 : i64, scratch_operands = 0 : i64, tpu.core_type = #tpu.core_type<tc>, window_params = [{transform_indices = @transform_0, window_bounds = array<i64: 128, 256>}, {pipeline_mode = #tpu.pipeline_mode<synchronous>, transform_indices = @transform_1, window_bounds = array<i64: 256, 256>}, {pipeline_mode = #tpu.pipeline_mode<synchronous>, transform_indices = @transform_2, window_bounds = array<i64: 1, 256>}, {transform_indices = @transform_3, window_bounds = array<i64: 128, 256>}]} {
    %c0 = arith.constant 0 : index
    %c0_0 = arith.constant 0 : index
    %0 = vector.load %arg1[%c0, %c0_0] : memref<128x256xf32, #tpu.memory_space<vmem>>, vector<128x256xf32>
    %1 = arith.truncf %0 : vector<128x256xf32> to vector<128x256xbf16>
    %c0_1 = arith.constant 0 : index
    %c0_2 = arith.constant 0 : index
    %2 = vector.load %arg2[%c0_1, %c0_2] : memref<256x256xbf16, #tpu.memory_space<vmem>>, vector<256x256xbf16>
    %cst = arith.constant dense<0.000000e+00> : vector<128x256xf32>
    %3 = tpu.matmul %1, %2, %cst {dimension_numbers = #tpu.dot_dimension_numbers<[1], [0], [0], [1], [0, 0, 1, 1], [], []>} : vector<128x256xbf16>, vector<256x256xbf16>, vector<128x256xf32> -> vector<128x256xf32>
    %c0_3 = arith.constant 0 : index
    %c0_4 = arith.constant 0 : index
    %4 = vector.load %arg3[%c0_3, %c0_4] : memref<1x256xf32, #tpu.memory_space<vmem>>, vector<1x256xf32>
    %5 = vector.broadcast %4 : vector<1x256xf32> to vector<128x256xf32>
    %6 = arith.addf %3, %5 : vector<128x256xf32>
    %7 = arith.mulf %6, %6 : vector<128x256xf32>
    %cst_5 = arith.constant dense<0.000000e+00> : vector<128xf32>
    %8 = vector.multi_reduction <add>, %7, %cst_5 [1] : vector<128x256xf32> to vector<128xf32>
    %9 = vector.shape_cast %8 : vector<128xf32> to vector<128x1xf32>
    %cst_6 = arith.constant 1.000000e-24 : f32
    %10 = vector.broadcast %cst_6 : f32 to vector<128x1xf32>
    %11 = arith.maximumf %9, %10 : vector<128x1xf32>
    %12 = math.rsqrt %11 : vector<128x1xf32>
    %13 = vector.broadcast %12 : vector<128x1xf32> to vector<128x256xf32>
    %14 = arith.mulf %6, %13 : vector<128x256xf32>
    %c0_7 = arith.constant 0 : index
    %c0_8 = arith.constant 0 : index
    %15 = vector.load %arg4[%c0_7, %c0_8] : memref<128x256xf32, #tpu.memory_space<vmem>>, vector<128x256xf32>
    tpu.vector_store %arg4[%c0_7, %c0_8], %14 {strides = array<i32>} : memref<128x256xf32, #tpu.memory_space<vmem>>, vector<128x256xf32>,
    return
  }
  func.func @transform_0(%arg0: i32) -> (i32, i32) {
    %c0_i32 = arith.constant 0 : i32
    %c0_i32_0 = arith.constant 0 : i32
    return %arg0, %c0_i32 : i32, i32
  }
  func.func @transform_1(%arg0: i32) -> (i32, i32) {
    %c0_i32 = arith.constant 0 : i32
    %c0_i32_0 = arith.constant 0 : i32
    %c0_i32_1 = arith.constant 0 : i32
    return %c0_i32, %c0_i32_0 : i32, i32
  }
  func.func @transform_2(%arg0: i32) -> (i32, i32) {
    %c0_i32 = arith.constant 0 : i32
    %c0_i32_0 = arith.constant 0 : i32
    %c0_i32_1 = arith.constant 0 : i32
    return %c0_i32, %c0_i32_0 : i32, i32
  }
  func.func @transform_3(%arg0: i32) -> (i32, i32) {
    %c0_i32 = arith.constant 0 : i32
    %c0_i32_0 = arith.constant 0 : i32
    return %arg0, %c0_i32 : i32, i32
  }
}

</mosaic_0001>

<llo_original>
// kernel: naver_mlp_forward.1
$region0: #{naver_mlp_forward.1}
  #allocation0 [shape = 'u32[]', space=smem, size = 0x4, offset = 0x4, fixed_abs, tag = 'smem constant byte address 0x4 - core index']
  #allocation1 [shape = 'u32[144,128]{1,0:T(1,128)}', space=vmem, size = 0x12000, scoped, tag = 'internal scratch']
  %s0 = inlined_call_operand.hbm [shape: f32[256,256], index: 0, kind: input, shape index: {}]
  %s1 = inlined_call_operand.hbm [shape: bf16[256,256], index: 1, kind: input, shape index: {}]
  %s2 = inlined_call_operand.vmem [shape: f32[1,256], index: 2, kind: input, shape index: {}]
  %s3 = inlined_call_operand.hbm [shape: f32[256,256], index: 3, kind: output, shape index: {}]
  %s4 = sld [smem:[#allocation0]]
  $region53: #{naver_mlp_forward.1} parent=0
    _
  %s6 = ssub.s32 1, %s4
  %s7 = scalar_select 0, %s6, %s4
  $region1: #{naver_mlp_forward.1} parent=0
    #allocation2 [shape = 'u8[262144]{0}', space=vmem, size = 0x40000, scoped, tag = 'input window, operand 0']
    #allocation3 [shape = 's32[2]{0}', space=sflag, size = 0x8, scoped, tag = 'scoped memory for naver_mlp_forward.1']
    #allocation4 [shape = 's32[2]{0}', space=sflag, size = 0x8, scoped, tag = 'scoped memory for naver_mlp_forward.1']
    #allocation5 [shape = 'u8[131072]{0}', space=vmem, size = 0x20000, scoped, tag = 'input window, operand 1, single buffered']
    #allocation6 [shape = 's32[1]{0}', space=sflag, size = 0x4, scoped, tag = 'scoped memory for naver_mlp_forward.1']
    #allocation7 [shape = 'u8[262144]{0}', space=vmem, size = 0x40000, scoped, tag = 'output window, operand 0']
    %8 = vsyncpa [#allocation3], 0
    %s9 = scalar_lea.sflag [#allocation3], 1
    %10 = vsyncpa %s9, 0
    %11 = vsyncpa [#allocation6], 0
    %12 = vsyncpa [#allocation4], 0
    %s13 = scalar_lea.sflag [#allocation4], 1
    %14 = vsyncpa %s13, 0
    loop: start=0, step=1, limit=4
    $region2: #{naver_mlp_forward.1} parent=1 // loop_pre_header
      _
    $region3: #{naver_mlp_forward.1} parent=1 // loop_header
      %s16 = sphi 0, %s20
      %p17 = scmp.ge.s32.totalorder %s16, 4
      %s26 = sphi 0, %s28
      %s29 = sphi 0, %s26
      %s30 = sphi 0, %s29
      %s46 = sphi 0, %s30
      %s50 = sphi 0, %s50
      %s52 = sphi 0, %s50
      %s53 = sphi 0, %s52
      %s67 = sphi 0, %s53
      %s71 = sphi 0, %s71
      %s73 = sphi 0, %s71
      %s74 = sphi 0, %s73
      %s88 = sphi 0, %s74
      %s94 = sphi 0, %s96
      %s97 = sphi 0, %s94
      %s98 = sphi 0, %s97
      %s114 = sphi 0, %s98
    $region4: #{naver_mlp_forward.1} parent=1 // loop_header_branch
      %19 = sbr.rel (%p17) target = $region8
    $region5: #{naver_mlp_forward.1} parent=1 // loop_body
      %s21 = ssub.s32 %s16, 1
      %s22 = ssub.s32 %s16, 2
      %s23 = sadd.s32 %s16, 1
      %s24 = ssub.s32 %s16, %s23
      %p25 = scmp.eq.s32.totalorder %s24, 0
      %s27 = sadd.s32 %s26, 1
      %s28 = scalar_select %p25, %s26, %s27
      %p31 = pneg %p25
      %p32 = scmp.eq.s32.totalorder %s16, 1
      %p33 = por %p31, %p32
      %p34 = scmp.ne.s32.totalorder %s26, %s29
      %p35 = scmp.eq.s32.totalorder %s16, 0
      %p36 = por %p34, %p35
      %p37 = scmp.ne.s32.totalorder %s26, %s29
      %p38 = scmp.eq.s32.totalorder %s21, 1
      %p39 = por %p37, %p38
      %p40 = scmp.ne.s32.totalorder %s29, %s30
      %p41 = scmp.eq.s32.totalorder %s21, 0
      %p42 = por %p40, %p41
      %p43 = scmp.ne.s32.totalorder %s29, %s30
      %p44 = scmp.eq.s32.totalorder %s22, 1
      %p45 = por %p43, %p44
      %p47 = scmp.ne.s32.totalorder %s30, %s46
      %p48 = scmp.eq.s32.totalorder %s22, 0
      %p49 = por %p47, %p48
      %s51 = sadd.s32 %s50, 1
      %p54 = scmp.eq.s32.totalorder %s16, 1
      %p55 = scmp.ne.s32.totalorder %s50, %s52
      %p56 = scmp.eq.s32.totalorder %s16, 0
      %p57 = por %p55, %p56
      %p58 = scmp.ne.s32.totalorder %s50, %s52
      %p59 = scmp.eq.s32.totalorder %s21, 1
      %p60 = por %p58, %p59
      %p61 = scmp.ne.s32.totalorder %s52, %s53
      %p62 = scmp.eq.s32.totalorder %s21, 0
      %p63 = por %p61, %p62
      %p64 = scmp.ne.s32.totalorder %s52, %s53
      %p65 = scmp.eq.s32.totalorder %s22, 1
      %p66 = por %p64, %p65
      %p68 = scmp.ne.s32.totalorder %s53, %s67
      %p69 = scmp.eq.s32.totalorder %s22, 0
      %p70 = por %p68, %p69
      %s72 = sadd.s32 %s71, 1
      %p75 = scmp.eq.s32.totalorder %s16, 1
      %p76 = scmp.ne.s32.totalorder %s71, %s73
      %p77 = scmp.eq.s32.totalorder %s16, 0
      %p78 = por %p76, %p77
      %p79 = scmp.ne.s32.totalorder %s71, %s73
      %p80 = scmp.eq.s32.totalorder %s21, 1
      %p81 = por %p79, %p80
      %p82 = scmp.ne.s32.totalorder %s73, %s74
      %p83 = scmp.eq.s32.totalorder %s21, 0
      %p84 = por %p82, %p83
      %p85 = scmp.ne.s32.totalorder %s73, %s74
      %p86 = scmp.eq.s32.totalorder %s22, 1
      %p87 = por %p85, %p86
      %p89 = scmp.ne.s32.totalorder %s74, %s88
      %p90 = scmp.eq.s32.totalorder %s22, 0
      %p91 = por %p89, %p90
      %s92 = ssub.s32 %s16, %s23
      %p93 = scmp.eq.s32.totalorder %s92, 0
      %s95 = sadd.s32 %s94, 1
      %s96 = scalar_select %p93, %s94, %s95
      %p99 = pneg %p93
      %p100 = scmp.eq.s32.totalorder %s16, 1
      %p101 = por %p99, %p100
      %p102 = scmp.ne.s32.totalorder %s94, %s97
      %p103 = scmp.eq.s32.totalorder %s16, 0
      %p104 = por %p102, %p103
      %p105 = scmp.ne.s32.totalorder %s94, %s97
      %p106 = scmp.eq.s32.totalorder %s21, 1
      %p107 = por %p105, %p106
      %p108 = scmp.ne.s32.totalorder %s97, %s98
      %p109 = scmp.eq.s32.totalorder %s21, 0
      %p110 = por %p108, %p109
      %p111 = scmp.ne.s32.totalorder %s97, %s98
      %p112 = scmp.eq.s32.totalorder %s22, 1
      %p113 = por %p111, %p112
      %p115 = scmp.ne.s32.totalorder %s98, %s114
      %p116 = scmp.eq.s32.totalorder %s22, 0
      %p117 = por %p115, %p116
      %p118 = scmp.le.s32.totalorder 1, %s16
      %p119 = scmp.lt.s32.totalorder %s16, 3
      %p120 = pnand %p118, %p119
      %p121 = pneg %p120
      // Predicated region
      $region9: #{naver_mlp_forward.1} parent=5 // pred_check
        _
      $region10: #{naver_mlp_forward.1} parent=5 // pred_check_branch
        %123 = sbr.rel (%p120) target = $region12
      $region11: #{naver_mlp_forward.1} parent=5 // pred_region
        %s124 = ssub.s32 %s16, 1
        // Predicated region
        $region13: #{naver_mlp_forward.1} parent=11 // pred_check
          %p125 = pneg %p63
        $region14: #{naver_mlp_forward.1} parent=11 // pred_check_branch
          %127 = sbr.rel (%p125) target = $region16
        $region15: #{naver_mlp_forward.1} parent=11 // pred_region
          %s129 = ssub.s32 4096, 4096
          %130 = vsyncadd [#allocation6], %s129
          %s131 = sshll.u32 [#allocation5], 4
          %s132 = int_to_ptr.vmem [resolvable:$true] %s131
          %137 = dma.hbm_to_vmem [thread:$0]  %s1, 4096, %s132, [#allocation6], 128, 128, 8
        $region16: #{naver_mlp_forward.1} parent=11 // pred_fallthru
          _
        // Predicated region
        $region17: #{naver_mlp_forward.1} parent=11 // pred_check
          %p138 = pneg %p84
        $region18: #{naver_mlp_forward.1} parent=11 // pred_check_branch
          %140 = sbr.rel (%p138) target = $region20
        $region19: #{naver_mlp_forward.1} parent=11 // pred_region
          _
        $region20: #{naver_mlp_forward.1} parent=11 // pred_fallthru
          _
      $region12: #{naver_mlp_forward.1} parent=5 // pred_fallthru
        _
      %p141 = scmp.lt.s32.totalorder %s16, 2
      // Predicated region
      $region21: #{naver_mlp_forward.1} parent=5 // pred_check
        %p142 = pneg %p141
      $region22: #{naver_mlp_forward.1} parent=5 // pred_check_branch
        %144 = sbr.rel (%p142) target = $region24
      $region23: #{naver_mlp_forward.1} parent=5 // pred_region
        // Predicated region
        $region25: #{naver_mlp_forward.1} parent=23 // pred_check
          %p145 = pneg %p36
        $region26: #{naver_mlp_forward.1} parent=23 // pred_check_branch
          %147 = sbr.rel (%p145) target = $region28
        $region27: #{naver_mlp_forward.1} parent=23 // pred_region
          %s148 = sand.u32 %s26, 1
          %s149 = scalar_lea.sflag [#allocation3], %s148
          %s150 = sand.u32 %s26, 1
          %s151 = smul.addr %s150, 256
          %s152 = scalar_lea.vmem [#allocation2], %s151
          %s153 = smul.u32 16, %s16
          %s155 = ssub.s32 4096, 4096
          %156 = vsyncadd %s149, %s155
          %s157 = smul.addr %s153, 2
          %s158 = smul.addr %s157, 128
          %s159 = scalar_lea.hbm %s0, %s158
          %s160 = sshll.u32 %s152, 4
          %s161 = int_to_ptr.vmem [resolvable:$true] %s160
          %166 = dma.hbm_to_vmem [thread:$0]  %s159, 4096, %s161, %s149, 256, 256, 16
        $region28: #{naver_mlp_forward.1} parent=23 // pred_fallthru
          _
      $region24: #{naver_mlp_forward.1} parent=5 // pred_fallthru
        _
      %p167 = scmp.le.s32.totalorder 1, %s16
      %p168 = scmp.lt.s32.totalorder %s16, 3
      %p169 = pnand %p167, %p168
      %p170 = pneg %p169
      // Predicated region
      $region29: #{naver_mlp_forward.1} parent=5 // pred_check
        _
      $region30: #{naver_mlp_forward.1} parent=5 // pred_check_branch
        %172 = sbr.rel (%p169) target = $region32
      $region31: #{naver_mlp_forward.1} parent=5 // pred_region
        %s173 = ssub.s32 %s16, 1
        %s174 = sand.u32 %s29, 1
        %s175 = scalar_lea.sflag [#allocation3], %s174
        %s176 = sand.u32 %s29, 1
        %s177 = smul.addr %s176, 256
        %s178 = scalar_lea.vmem [#allocation2], %s177
        // Predicated region
        $region33: #{naver_mlp_forward.1} parent=31 // pred_check
          %p179 = pneg %p42
        $region34: #{naver_mlp_forward.1} parent=31 // pred_check_branch
          %181 = sbr.rel (%p179) target = $region36
        $region35: #{naver_mlp_forward.1} parent=31 // pred_region
          %182 = dma.done %s175, 4096
        $region36: #{naver_mlp_forward.1} parent=31 // pred_fallthru
          _
        // Predicated region
        $region37: #{naver_mlp_forward.1} parent=31 // pred_check
          %p183 = pneg %p63
        $region38: #{naver_mlp_forward.1} parent=31 // pred_check_branch
          %185 = sbr.rel (%p183) target = $region40
        $region39: #{naver_mlp_forward.1} parent=31 // pred_region
          %186 = dma.done [#allocation6], 4096
        $region40: #{naver_mlp_forward.1} parent=31 // pred_fallthru
          _
        %s187 = sand.u32 %s29, 1
        %s188 = scalar_lea.sflag [#allocation3], %s187
        %s189 = sand.u32 %s29, 1
        %s190 = smul.addr %s189, 256
        %s191 = scalar_lea.vmem [#allocation2], %s190
        %p192 = pneg %p42
        %p193 = pneg %p39
        %p194 = pneg %p63
        %p195 = pneg %p60
        %p196 = pneg %p84
        %p197 = pneg %p81
        %p198 = pneg %p110
        %p199 = pneg %p107
        %s200 = sand.u32 %s97, 1
        %s201 = scalar_lea.sflag [#allocation4], %s200
        %s202 = sand.u32 %s97, 1
        %s203 = smul.addr %s202, 256
        %s204 = scalar_lea.vmem [#allocation7], %s203
        %s205 = smul.u32 16, %s21
        %s206 = smul.u32 16, %s21
        %v207 = vld [vmem:[%s178] sm:$0xff]
        %v208 = vld [vmem:[%s178 + $0x8] sm:$0xff]
        %v209 = vld [vmem:[%s178 + $0x10] sm:$0xff]
        %v210 = vld [vmem:[%s178 + $0x18] sm:$0xff]
        %v211 = vld [vmem:[%s178 + $0x20] sm:$0xff]
        %v212 = vld [vmem:[%s178 + $0x28] sm:$0xff]
        %v213 = vld [vmem:[%s178 + $0x30] sm:$0xff]
        %v214 = vld [vmem:[%s178 + $0x38] sm:$0xff]
        %v215 = vld [vmem:[%s178 + $0x40] sm:$0xff]
        %v216 = vld [vmem:[%s178 + $0x48] sm:$0xff]
        %v217 = vld [vmem:[%s178 + $0x50] sm:$0xff]
        %v218 = vld [vmem:[%s178 + $0x58] sm:$0xff]
        %v219 = vld [vmem:[%s178 + $0x60] sm:$0xff]
        %v220 = vld [vmem:[%s178 + $0x68] sm:$0xff]
        %v221 = vld [vmem:[%s178 + $0x70] sm:$0xff]
        %v222 = vld [vmem:[%s178 + $0x78] sm:$0xff]
        %v223 = vld [vmem:[%s178 + $0x80] sm:$0xff]
        %v224 = vld [vmem:[%s178 + $0x88] sm:$0xff]
        %v225 = vld [vmem:[%s178 + $0x90] sm:$0xff]
        %v226 = vld [vmem:[%s178 + $0x98] sm:$0xff]
        %v227 = vld [vmem:[%s178 + $0xa0] sm:$0xff]
        %v228 = vld [vmem:[%s178 + $0xa8] sm:$0xff]
        %v229 = vld [vmem:[%s178 + $0xb0] sm:$0xff]
        %v230 = vld [vmem:[%s178 + $0xb8] sm:$0xff]
        %v231 = vld [vmem:[%s178 + $0xc0] sm:$0xff]
        %v232 = vld [vmem:[%s178 + $0xc8] sm:$0xff]
        %v233 = vld [vmem:[%s178 + $0xd0] sm:$0xff]
        %v234 = vld [vmem:[%s178 + $0xd8] sm:$0xff]
        %v235 = vld [vmem:[%s178 + $0xe0] sm:$0xff]
        %v236 = vld [vmem:[%s178 + $0xe8] sm:$0xff]
        %v237 = vld [vmem:[%s178 + $0xf0] sm:$0xff]
        %v238 = vld [vmem:[%s178 + $0xf8] sm:$0xff]
        %v239 = vpack.c.bf16 %v209, %v207
        %v240 = vpack.c.bf16 %v210, %v208
        %v241 = vpack.c.bf16 %v213, %v211
        %v242 = vpack.c.bf16 %v214, %v212
        %v243 = vpack.c.bf16 %v217, %v215
        %v244 = vpack.c.bf16 %v218, %v216
        %v245 = vpack.c.bf16 %v221, %v219
        %v246 = vpack.c.bf16 %v222, %v220
        %v247 = vpack.c.bf16 %v225, %v223
        %v248 = vpack.c.bf16 %v226, %v224
        %v249 = vpack.c.bf16 %v229, %v227
        %v250 = vpack.c.bf16 %v230, %v228
        %v251 = vpack.c.bf16 %v233, %v231
        %v252 = vpack.c.bf16 %v234, %v232
        %v253 = vpack.c.bf16 %v237, %v235
        %v254 = vpack.c.bf16 %v238, %v236
        %v255 = vld [vmem:[#allocation5] sm:$0xff]
        %v256 = vld [vmem:[#allocation5 + $0x8] sm:$0xff]
        %v257 = vld [vmem:[#allocation5 + $0x10] sm:$0xff]
        %v258 = vld [vmem:[#allocation5 + $0x18] sm:$0xff]
        %v259 = vld [vmem:[#allocation5 + $0x20] sm:$0xff]
        %v260 = vld [vmem:[#allocation5 + $0x28] sm:$0xff]
        %v261 = vld [vmem:[#allocation5 + $0x30] sm:$0xff]
        %v262 = vld [vmem:[#allocation5 + $0x38] sm:$0xff]
        %v263 = vld [vmem:[#allocation5 + $0x40] sm:$0xff]
        %v264 = vld [vmem:[#allocation5 + $0x48] sm:$0xff]
        %v265 = vld [vmem:[#allocation5 + $0x50] sm:$0xff]
        %v266 = vld [vmem:[#allocation5 + $0x58] sm:$0xff]
        %v267 = vld [vmem:[#allocation5 + $0x60] sm:$0xff]
        %v268 = vld [vmem:[#allocation5 + $0x68] sm:$0xff]
        %v269 = vld [vmem:[#allocation5 + $0x70] sm:$0xff]
        %v270 = vld [vmem:[#allocation5 + $0x78] sm:$0xff]
        %v271 = vld [vmem:[#allocation5 + $0x80] sm:$0xff]
        %v272 = vld [vmem:[#allocation5 + $0x88] sm:$0xff]
        %v273 = vld [vmem:[#allocation5 + $0x90] sm:$0xff]
        %v274 = vld [vmem:[#allocation5 + $0x98] sm:$0xff]
        %v275 = vld [vmem:[#allocation5 + $0xa0] sm:$0xff]
        %v276 = vld [vmem:[#allocation5 + $0xa8] sm:$0xff]
        %v277 = vld [vmem:[#allocation5 + $0xb0] sm:$0xff]
        %v278 = vld [vmem:[#allocation5 + $0xb8] sm:$0xff]
        %v279 = vld [vmem:[#allocation5 + $0xc0] sm:$0xff]
        %v280 = vld [vmem:[#allocation5 + $0xc8] sm:$0xff]
        %v281 = vld [vmem:[#allocation5 + $0xd0] sm:$0xff]
        %v282 = vld [vmem:[#allocation5 + $0xd8] sm:$0xff]
        %v283 = vld [vmem:[#allocation5 + $0xe0] sm:$0xff]
        %v284 = vld [vmem:[#allocation5 + $0xe8] sm:$0xff]
        %v285 = vld [vmem:[#allocation5 + $0xf0] sm:$0xff]
        %v286 = vld [vmem:[#allocation5 + $0xf8] sm:$0xff]
        %v287 = vld [vmem:[%s2] sm:$0x3]
        %v289 = vlaneseq
        %v290 = vshrl.u32 %v289, 7
        %v291 = vsub.s32 0, %v290
        %v292 = vrot.slane %v287, %v291
        %v293 = vlaneseq
        %v294 = vshrl.u32 %v293, 7
        %v295 = vsub.s32 1, %v294
        %v296 = vrot.slane %v287, %v295
        %v331 = vunpack.c.l.b16 %v255
        %v332 = vunpack.c.h.b16 %v255
        %v333 = vunpack.c.l.b16 %v256
        %v334 = vunpack.c.h.b16 %v256
        %v335 = vunpack.c.l.b16 %v257
        %v336 = vunpack.c.h.b16 %v257
        %v337 = vunpack.c.l.b16 %v258
        %v338 = vunpack.c.h.b16 %v258
        %v339 = vunpack.c.l.b16 %v259
        %v340 = vunpack.c.h.b16 %v259
        %v341 = vunpack.c.l.b16 %v260
        %v342 = vunpack.c.h.b16 %v260
        %v343 = vunpack.c.l.b16 %v261
        %v344 = vunpack.c.h.b16 %v261
        %v345 = vunpack.c.l.b16 %v262
        %v346 = vunpack.c.h.b16 %v262
        %v347 = vunpack.c.l.b16 %v263
        %v348 = vunpack.c.h.b16 %v263
        %v349 = vunpack.c.l.b16 %v264
        %v350 = vunpack.c.h.b16 %v264
        %v351 = vunpack.c.l.b16 %v265
        %v352 = vunpack.c.h.b16 %v265
        %v353 = vunpack.c.l.b16 %v266
        %v354 = vunpack.c.h.b16 %v266
        %v355 = vunpack.c.l.b16 %v267
        %v356 = vunpack.c.h.b16 %v267
        %v357 = vunpack.c.l.b16 %v268
        %v358 = vunpack.c.h.b16 %v268
        %v359 = vunpack.c.l.b16 %v269
        %v360 = vunpack.c.h.b16 %v269
        %v361 = vunpack.c.l.b16 %v270
        %v362 = vunpack.c.h.b16 %v270
        %v363 = vunpack.c.l.b16 %v271
        %v364 = vunpack.c.h.b16 %v271
        %v365 = vunpack.c.l.b16 %v272
        %v366 = vunpack.c.h.b16 %v272
        %v367 = vunpack.c.l.b16 %v273
        %v368 = vunpack.c.h.b16 %v273
        %v369 = vunpack.c.l.b16 %v274
        %v370 = vunpack.c.h.b16 %v274
        %v371 = vunpack.c.l.b16 %v275
        %v372 = vunpack.c.h.b16 %v275
        %v373 = vunpack.c.l.b16 %v276
        %v374 = vunpack.c.h.b16 %v276
        %v375 = vunpack.c.l.b16 %v277
        %v376 = vunpack.c.h.b16 %v277
        %v377 = vunpack.c.l.b16 %v278
        %v378 = vunpack.c.h.b16 %v278
        %v379 = vunpack.c.l.b16 %v279
        %v380 = vunpack.c.h.b16 %v279
        %v381 = vunpack.c.l.b16 %v280
        %v382 = vunpack.c.h.b16 %v280
        %v383 = vunpack.c.l.b16 %v281
        %v384 = vunpack.c.h.b16 %v281
        %v385 = vunpack.c.l.b16 %v282
        %v386 = vunpack.c.h.b16 %v282
        %v387 = vunpack.c.l.b16 %v283
        %v388 = vunpack.c.h.b16 %v283
        %v389 = vunpack.c.l.b16 %v284
        %v390 = vunpack.c.h.b16 %v284
        %v391 = vunpack.c.l.b16 %v285
        %v392 = vunpack.c.h.b16 %v285
        %v393 = vunpack.c.l.b16 %v286
        %v394 = vunpack.c.h.b16 %v286
        %v395 = vpack.c.b16 %v333, %v331
        %v396 = vpack.c.b16 %v334, %v332
        %v397 = vpack.c.b16 %v337, %v335
        %v398 = vpack.c.b16 %v338, %v336
        %v399 = vpack.c.b16 %v341, %v339
        %v400 = vpack.c.b16 %v342, %v340
        %v401 = vpack.c.b16 %v345, %v343
        %v402 = vpack.c.b16 %v346, %v344
        %v403 = vpack.c.b16 %v349, %v347
        %v404 = vpack.c.b16 %v350, %v348
        %v405 = vpack.c.b16 %v353, %v351
        %v406 = vpack.c.b16 %v354, %v352
        %v407 = vpack.c.b16 %v357, %v355
        %v408 = vpack.c.b16 %v358, %v356
        %v409 = vpack.c.b16 %v361, %v359
        %v410 = vpack.c.b16 %v362, %v360
        %v411 = vpack.c.b16 %v365, %v363
        %v412 = vpack.c.b16 %v366, %v364
        %v413 = vpack.c.b16 %v369, %v367
        %v414 = vpack.c.b16 %v370, %v368
        %v415 = vpack.c.b16 %v373, %v371
        %v416 = vpack.c.b16 %v374, %v372
        %v417 = vpack.c.b16 %v377, %v375
        %v418 = vpack.c.b16 %v378, %v376
        %v419 = vpack.c.b16 %v381, %v379
        %v420 = vpack.c.b16 %v382, %v380
        %v421 = vpack.c.b16 %v385, %v383
        %v422 = vpack.c.b16 %v386, %v384
        %v423 = vpack.c.b16 %v389, %v387
        %v424 = vpack.c.b16 %v390, %v388
        %v425 = vpack.c.b16 %v393, %v391
        %v426 = vpack.c.b16 %v394, %v392
        %459 = vmatprep.subr.bf16.mxu0 %v410
        %460 = vmatpush1.bf16.msra.mxu0 %v409
        %461 = vmatprep.subr.bf16.mxu0 %v408
        %462 = vmatpush1.bf16.msra.mxu0 %v407
        %463 = vmatprep.subr.bf16.mxu0 %v406
        %464 = vmatpush1.bf16.msra.mxu0 %v405
        %465 = vmatprep.subr.bf16.mxu0 %v404
        %466 = vmatpush1.bf16.msra.mxu0 %v403
        %467 = vmatprep.subr.bf16.mxu0 %v402
        %468 = vmatpush1.bf16.msra.mxu0 %v401
        %469 = vmatprep.subr.bf16.mxu0 %v400
        %470 = vmatpush1.bf16.msra.mxu0 %v399
        %471 = vmatprep.subr.bf16.mxu0 %v398
        %472 = vmatpush1.bf16.msra.mxu0 %v397
        %473 = vmatprep.subr.bf16.mxu0 %v396
        %474 = vmatpush1.bf16.msra.mxu0 %v395
        %475 = vmatprep.subr.bf16.mxu0 %v426
        %476 = vmatpush2.bf16.msra.mxu0 %v425
        %477 = vmatprep.subr.bf16.mxu0 %v424
        %478 = vmatpush2.bf16.msra.mxu0 %v423
        %479 = vmatprep.subr.bf16.mxu0 %v422
        %480 = vmatpush2.bf16.msra.mxu0 %v421
        %481 = vmatprep.subr.bf16.mxu0 %v420
        %482 = vmatpush2.bf16.msra.mxu0 %v419
        %483 = vmatprep.subr.bf16.mxu0 %v418
        %484 = vmatpush2.bf16.msra.mxu0 %v417
        %485 = vmatprep.subr.bf16.mxu0 %v416
        %486 = vmatpush2.bf16.msra.mxu0 %v415
        %487 = vmatprep.subr.bf16.mxu0 %v414
        %488 = vmatpush2.bf16.msra.mxu0 %v413
        %489 = vmatprep.subr.bf16.mxu0 %v412
        %490 = vmatpush2.bf16.msra.mxu0 %v411
        %491 = vmatprep.mubr.bf16.mxu0 %v240
        %492 = vmatmul.mubr.bf16.gmra.mxu0 %v239
        %v493 = vpop.f32.mrf.mxu0
        %v494 = vadd.f32 %v292, %v493
        %v495 = vpop.f32.mrf.mxu0
        %v496 = vadd.f32 %v296, %v495
        %v497 = vpop.f32.mrf.mxu0
        %v498 = vadd.f32 %v292, %v497
        %v499 = vpop.f32.mrf.mxu0
        %v500 = vadd.f32 %v296, %v499
        %501 = vmatprep.mubr.bf16.mxu0 %v242
        %502 = vmatmul.mubr.bf16.gmra.mxu0 %v241
        %v503 = vpop.f32.mrf.mxu0
        %v504 = vadd.f32 %v292, %v503
        %v505 = vpop.f32.mrf.mxu0
        %v506 = vadd.f32 %v296, %v505
        %v507 = vpop.f32.mrf.mxu0
        %v508 = vadd.f32 %v292, %v507
        %v509 = vpop.f32.mrf.mxu0
        %v510 = vadd.f32 %v296, %v509
        %511 = vmatprep.mubr.bf16.mxu0 %v244
        %512 = vmatmul.mubr.bf16.gmra.mxu0 %v243
        %v513 = vpop.f32.mrf.mxu0
        %v514 = vadd.f32 %v292, %v513
        %v515 = vpop.f32.mrf.mxu0
        %v516 = vadd.f32 %v296, %v515
        %v517 = vpop.f32.mrf.mxu0
        %v518 = vadd.f32 %v292, %v517
        %v519 = vpop.f32.mrf.mxu0
        %v520 = vadd.f32 %v296, %v519
        %521 = vmatprep.mubr.bf16.mxu0 %v246
        %522 = vmatmul.mubr.bf16.gmra.mxu0 %v245
        %v523 = vpop.f32.mrf.mxu0
        %v524 = vadd.f32 %v292, %v523
        %v525 = vpop.f32.mrf.mxu0
        %v526 = vadd.f32 %v296, %v525
        %v527 = vpop.f32.mrf.mxu0
        %v528 = vadd.f32 %v292, %v527
        %v529 = vpop.f32.mrf.mxu0
        %v530 = vadd.f32 %v296, %v529
        %531 = vmatprep.mubr.bf16.mxu0 %v248
        %532 = vmatmul.mubr.bf16.gmra.mxu0 %v247
        %v533 = vpop.f32.mrf.mxu0
        %v534 = vadd.f32 %v292, %v533
        %v535 = vpop.f32.mrf.mxu0
        %v536 = vadd.f32 %v296, %v535
        %v537 = vpop.f32.mrf.mxu0
        %v538 = vadd.f32 %v292, %v537
        %v539 = vpop.f32.mrf.mxu0
        %v540 = vadd.f32 %v296, %v539
        %541 = vmatprep.mubr.bf16.mxu0 %v250
        %542 = vmatmul.mubr.bf16.gmra.mxu0 %v249
        %v543 = vpop.f32.mrf.mxu0
        %v544 = vadd.f32 %v292, %v543
        %v545 = vpop.f32.mrf.mxu0
        %v546 = vadd.f32 %v296, %v545
        %v547 = vpop.f32.mrf.mxu0
        %v548 = vadd.f32 %v292, %v547
        %v549 = vpop.f32.mrf.mxu0
        %v550 = vadd.f32 %v296, %v549
        %551 = vmatprep.mubr.bf16.mxu0 %v252
        %552 = vmatmul.mubr.bf16.gmra.mxu0 %v251
        %v553 = vpop.f32.mrf.mxu0
        %v554 = vadd.f32 %v292, %v553
        %v555 = vpop.f32.mrf.mxu0
        %v556 = vadd.f32 %v296, %v555
        %v557 = vpop.f32.mrf.mxu0
        %v558 = vadd.f32 %v292, %v557
        %v559 = vpop.f32.mrf.mxu0
        %v560 = vadd.f32 %v296, %v559
        %561 = vmatprep.mubr.bf16.mxu0 %v254
        %562 = vmatmul.mubr.bf16.gmra.mxu0 %v253
        %v563 = vpop.f32.mrf.mxu0
        %v564 = vadd.f32 %v292, %v563
        %v565 = vpop.f32.mrf.mxu0
        %v566 = vadd.f32 %v296, %v565
        %v567 = vpop.f32.mrf.mxu0
        %v568 = vadd.f32 %v292, %v567
        %v569 = vpop.f32.mrf.mxu0
        %v570 = vadd.f32 %v296, %v569
        %571 = vdwg.mxu0
        %v572 = vmul.f32 %v494, %v494
        %v573 = vmul.f32 %v496, %v496
        %v574 = vmul.f32 %v498, %v498
        %v575 = vmul.f32 %v500, %v500
        %v576 = vmul.f32 %v504, %v504
        %v577 = vmul.f32 %v506, %v506
        %v578 = vmul.f32 %v508, %v508
        %v579 = vmul.f32 %v510, %v510
        %v580 = vmul.f32 %v514, %v514
        %v581 = vmul.f32 %v516, %v516
        %v582 = vmul.f32 %v518, %v518
        %v583 = vmul.f32 %v520, %v520
        %v584 = vmul.f32 %v524, %v524
        %v585 = vmul.f32 %v526, %v526
        %v586 = vmul.f32 %v528, %v528
        %v587 = vmul.f32 %v530, %v530
        %v588 = vmul.f32 %v534, %v534
        %v589 = vmul.f32 %v536, %v536
        %v590 = vmul.f32 %v538, %v538
        %v591 = vmul.f32 %v540, %v540
        %v592 = vmul.f32 %v544, %v544
        %v593 = vmul.f32 %v546, %v546
        %v594 = vmul.f32 %v548, %v548
        %v595 = vmul.f32 %v550, %v550
        %v596 = vmul.f32 %v554, %v554
        %v597 = vmul.f32 %v556, %v556
        %v598 = vmul.f32 %v558, %v558
        %v599 = vmul.f32 %v560, %v560
        %v600 = vmul.f32 %v564, %v564
        %v601 = vmul.f32 %v566, %v566
        %v602 = vmul.f32 %v568, %v568
        %v603 = vmul.f32 %v570, %v570
        %v604 = vadd.f32 %v572, %v573
        %605 = vadd.xlane.f32.xlu0 %v604
        %v606 = vpop.xlane.xlu0 %605
        %v607 = vadd.f32 %v574, %v575
        %608 = vadd.xlane.f32.xlu0 %v607
        %v609 = vpop.xlane.xlu0 %608
        %v610 = vadd.f32 %v576, %v577
        %611 = vadd.xlane.f32.xlu0 %v610
        %v612 = vpop.xlane.xlu0 %611
        %v613 = vadd.f32 %v578, %v579
        %614 = vadd.xlane.f32.xlu0 %v613
        %v615 = vpop.xlane.xlu0 %614
        %v616 = vadd.f32 %v580, %v581
        %617 = vadd.xlane.f32.xlu0 %v616
        %v618 = vpop.xlane.xlu0 %617
        %v619 = vadd.f32 %v582, %v583
        %620 = vadd.xlane.f32.xlu0 %v619
        %v621 = vpop.xlane.xlu0 %620
        %v622 = vadd.f32 %v584, %v585
        %623 = vadd.xlane.f32.xlu0 %v622
        %v624 = vpop.xlane.xlu0 %623
        %v625 = vadd.f32 %v586, %v587
        %626 = vadd.xlane.f32.xlu0 %v625
        %v627 = vpop.xlane.xlu0 %626
        %v628 = vadd.f32 %v588, %v589
        %629 = vadd.xlane.f32.xlu0 %v628
        %v630 = vpop.xlane.xlu0 %629
        %v631 = vadd.f32 %v590, %v591
        %632 = vadd.xlane.f32.xlu0 %v631
        %v633 = vpop.xlane.xlu0 %632
        %v634 = vadd.f32 %v592, %v593
        %635 = vadd.xlane.f32.xlu0 %v634
        %v636 = vpop.xlane.xlu0 %635
        %v637 = vadd.f32 %v594, %v595
        %638 = vadd.xlane.f32.xlu0 %v637
        %v639 = vpop.xlane.xlu0 %638
        %v640 = vadd.f32 %v596, %v597
        %641 = vadd.xlane.f32.xlu0 %v640
        %v642 = vpop.xlane.xlu0 %641
        %v643 = vadd.f32 %v598, %v599
        %644 = vadd.xlane.f32.xlu0 %v643
        %v645 = vpop.xlane.xlu0 %644
        %v646 = vadd.f32 %v600, %v601
        %647 = vadd.xlane.f32.xlu0 %v646
        %v648 = vpop.xlane.xlu0 %647
        %v649 = vadd.f32 %v602, %v603
        %650 = vadd.xlane.f32.xlu0 %v649
        %v651 = vpop.xlane.xlu0 %650
        %v652 = vmax.f32 %v606, 1e-24
        %v653 = vmax.f32 %v609, 1e-24
        %v654 = vmax.f32 %v612, 1e-24
        %v655 = vmax.f32 %v615, 1e-24
        %v656 = vmax.f32 %v618, 1e-24
        %v657 = vmax.f32 %v621, 1e-24
        %v658 = vmax.f32 %v624, 1e-24
        %v659 = vmax.f32 %v627, 1e-24
        %v660 = vmax.f32 %v630, 1e-24
        %v661 = vmax.f32 %v633, 1e-24
        %v662 = vmax.f32 %v636, 1e-24
        %v663 = vmax.f32 %v639, 1e-24
        %v664 = vmax.f32 %v642, 1e-24
        %v665 = vmax.f32 %v645, 1e-24
        %v666 = vmax.f32 %v648, 1e-24
        %v667 = vmax.f32 %v651, 1e-24
        %v668 = vrsqrt.pop %v652
        %v669 = vrsqrt.pop %v653
        %v670 = vrsqrt.pop %v654
        %v671 = vrsqrt.pop %v655
        %v672 = vrsqrt.pop %v656
        %v673 = vrsqrt.pop %v657
        %v674 = vrsqrt.pop %v658
        %v675 = vrsqrt.pop %v659
        %v676 = vrsqrt.pop %v660
        %v677 = vrsqrt.pop %v661
        %v678 = vrsqrt.pop %v662
        %v679 = vrsqrt.pop %v663
        %v680 = vrsqrt.pop %v664
        %v681 = vrsqrt.pop %v665
        %v682 = vrsqrt.pop %v666
        %v683 = vrsqrt.pop %v667
        %v684 = vmul.f32 %v494, %v668
        %v685 = vmul.f32 %v496, %v668
        %v686 = vmul.f32 %v498, %v669
        %v687 = vmul.f32 %v500, %v669
        %v688 = vmul.f32 %v504, %v670
        %v689 = vmul.f32 %v506, %v670
        %v690 = vmul.f32 %v508, %v671
        %v691 = vmul.f32 %v510, %v671
        %v692 = vmul.f32 %v514, %v672
        %v693 = vmul.f32 %v516, %v672
        %v694 = vmul.f32 %v518, %v673
        %v695 = vmul.f32 %v520, %v673
        %v696 = vmul.f32 %v524, %v674
        %v697 = vmul.f32 %v526, %v674
        %v698 = vmul.f32 %v528, %v675
        %v699 = vmul.f32 %v530, %v675
        %v700 = vmul.f32 %v534, %v676
        %v701 = vmul.f32 %v536, %v676
        %v702 = vmul.f32 %v538, %v677
        %v703 = vmul.f32 %v540, %v677
        %v704 = vmul.f32 %v544, %v678
        %v705 = vmul.f32 %v546, %v678
        %v706 = vmul.f32 %v548, %v679
        %v707 = vmul.f32 %v550, %v679
        %v708 = vmul.f32 %v554, %v680
        %v709 = vmul.f32 %v556, %v680
        %v710 = vmul.f32 %v558, %v681
        %v711 = vmul.f32 %v560, %v681
        %v712 = vmul.f32 %v564, %v682
        %v713 = vmul.f32 %v566, %v682
        %v714 = vmul.f32 %v568, %v683
        %v715 = vmul.f32 %v570, %v683
        %716 = vst [vmem:[%s204] sm:$0xff] %v684
        %717 = vst [vmem:[%s204 + $0x8] sm:$0xff] %v685
        %718 = vst [vmem:[%s204 + $0x10] sm:$0xff] %v686
        %719 = vst [vmem:[%s204 + $0x18] sm:$0xff] %v687
        %720 = vst [vmem:[%s204 + $0x20] sm:$0xff] %v688
        %721 = vst [vmem:[%s204 + $0x28] sm:$0xff] %v689
        %722 = vst [vmem:[%s204 + $0x30] sm:$0xff] %v690
        %723 = vst [vmem:[%s204 + $0x38] sm:$0xff] %v691
        %724 = vst [vmem:[%s204 + $0x40] sm:$0xff] %v692
        %725 = vst [vmem:[%s204 + $0x48] sm:$0xff] %v693
        %726 = vst [vmem:[%s204 + $0x50] sm:$0xff] %v694
        %727 = vst [vmem:[%s204 + $0x58] sm:$0xff] %v695
        %728 = vst [vmem:[%s204 + $0x60] sm:$0xff] %v696
        %729 = vst [vmem:[%s204 + $0x68] sm:$0xff] %v697
        %730 = vst [vmem:[%s204 + $0x70] sm:$0xff] %v698
        %731 = vst [vmem:[%s204 + $0x78] sm:$0xff] %v699
        %732 = vst [vmem:[%s204 + $0x80] sm:$0xff] %v700
        %733 = vst [vmem:[%s204 + $0x88] sm:$0xff] %v701
        %734 = vst [vmem:[%s204 + $0x90] sm:$0xff] %v702
        %735 = vst [vmem:[%s204 + $0x98] sm:$0xff] %v703
        %736 = vst [vmem:[%s204 + $0xa0] sm:$0xff] %v704
        %737 = vst [vmem:[%s204 + $0xa8] sm:$0xff] %v705
        %738 = vst [vmem:[%s204 + $0xb0] sm:$0xff] %v706
        %739 = vst [vmem:[%s204 + $0xb8] sm:$0xff] %v707
        %740 = vst [vmem:[%s204 + $0xc0] sm:$0xff] %v708
        %741 = vst [vmem:[%s204 + $0xc8] sm:$0xff] %v709
        %742 = vst [vmem:[%s204 + $0xd0] sm:$0xff] %v710
        %743 = vst [vmem:[%s204 + $0xd8] sm:$0xff] %v711
        %744 = vst [vmem:[%s204 + $0xe0] sm:$0xff] %v712
        %745 = vst [vmem:[%s204 + $0xe8] sm:$0xff] %v713
        %746 = vst [vmem:[%s204 + $0xf0] sm:$0xff] %v714
        %747 = vst [vmem:[%s204 + $0xf8] sm:$0xff] %v715
        %s748 = sand.u32 %s97, 1
        %s749 = scalar_lea.sflag [#allocation4], %s748
        %s750 = sand.u32 %s97, 1
        %s751 = smul.addr %s750, 256
        %s752 = scalar_lea.vmem [#allocation7], %s751
        // Predicated region
        $region41: #{naver_mlp_forward.1} parent=31 // pred_check
          %p753 = pneg %p107
        $region42: #{naver_mlp_forward.1} parent=31 // pred_check_branch
          %755 = sbr.rel (%p753) target = $region44
        $region43: #{naver_mlp_forward.1} parent=31 // pred_region
          %s756 = smul.u32 16, %s21
          %s758 = ssub.s32 4096, 4096
          %759 = vsyncadd %s749, %s758
          %s760 = smul.addr %s756, 2
          %s761 = smul.addr %s760, 128
          %s762 = scalar_lea.hbm %s3, %s761
          %s763 = sshll.u32 %s752, 4
          %s764 = int_to_ptr.vmem [resolvable:$true] %s763
          %769 = dma.vmem_to_hbm [thread:$0]  %s764, 4096, %s762, %s749, 256, 256, 16
        $region44: #{naver_mlp_forward.1} parent=31 // pred_fallthru
          _
      $region32: #{naver_mlp_forward.1} parent=5 // pred_fallthru
        _
      %p770 = scmp.le.s32.totalorder 2, %s16
      // Predicated region
      $region45: #{naver_mlp_forward.1} parent=5 // pred_check
        %p771 = pneg %p770
      $region46: #{naver_mlp_forward.1} parent=5 // pred_check_branch
        %773 = sbr.rel (%p771) target = $region48
      $region47: #{naver_mlp_forward.1} parent=5 // pred_region
        %s774 = ssub.s32 %s16, 2
        // Predicated region
        $region49: #{naver_mlp_forward.1} parent=47 // pred_check
          %p775 = pneg %p113
        $region50: #{naver_mlp_forward.1} parent=47 // pred_check_branch
          %777 = sbr.rel (%p775) target = $region52
        $region51: #{naver_mlp_forward.1} parent=47 // pred_region
          %s778 = sand.u32 %s98, 1
          %s779 = scalar_lea.sflag [#allocation4], %s778
          %s780 = sand.u32 %s98, 1
          %s781 = smul.addr %s780, 256
          %s782 = scalar_lea.vmem [#allocation7], %s781
          %783 = dma.done %s779, 4096
        $region52: #{naver_mlp_forward.1} parent=47 // pred_fallthru
          _
      $region48: #{naver_mlp_forward.1} parent=5 // pred_fallthru
        _
    $region6: #{naver_mlp_forward.1} parent=1 // loop_footer
      %s20 = sadd.s32 1, %s16
    $region7: #{naver_mlp_forward.1} parent=1 // loop_footer_branch
      %15 = sbr.rel target = $region3
    $region8: #{naver_mlp_forward.1} parent=1 // loop_exit
      _
    %784 = vsyncpa [#allocation3], 1
    %s785 = scalar_lea.sflag [#allocation3], 1
    %786 = vsyncpa %s785, 1
    %787 = vsyncpa [#allocation6], 1
    %788 = vsyncpa [#allocation4], 1
    %s789 = scalar_lea.sflag [#allocation4], 1
    %790 = vsyncpa %s789, 1

</llo_original>
